<compile_context>
chip_gen: v6e
topology: v6e:2x2x1
jax: 0.10.0
libtpu: 0.0.40
codegen_flags: <defaults>
</compile_context>

<pallas_src>
import math

import jax
import jax.numpy as jnp
from jax.experimental import pallas as pl
from jax.experimental.pallas import tpu as pltpu

LATENT_DIM = 100
LATENT_PAD = 128          # contraction dim padded to one full lane tile
HIDDEN = 256


def _round_up(x, m):
    return ((x + m - 1) // m) * m


def _default_bf16_epilogue():
    """bf16 tanh epilogue only on chips whose EUP has a bf16 path (v6e/v7x)."""
    try:
        kind = jax.devices()[0].device_kind.lower()
    except Exception:
        return False
    return not any(v in kind for v in ("v2", "v3", "v4", "v5"))


# -----------------------------------------------------------------------------
# Kernel factory: fused 3-layer MLP for one batch tile.  Weight/bias blocks are
# grid-invariant (constant index_map) -> resident in VMEM across iterations.
# `out_dim`/`out_pad`/`bf16_epilogue` are static Python values closed over.
# -----------------------------------------------------------------------------
def _make_kernel(out_dim, out_pad, bf16_epilogue):
    def kernel(z_ref, w1_ref, b1_ref, w2_ref, b2_ref, w3_ref, b3_ref, out_ref):
        # Layer 1: (tm,128)bf16 @ (128,256)bf16 -> f32 acc, bias+ReLU in f32
        h1 = jnp.dot(z_ref[...], w1_ref[...], preferred_element_type=jnp.float32)
        h1 = jnp.maximum(h1 + b1_ref[...], 0.0).astype(jnp.bfloat16)

        # Layer 2: (tm,256)bf16 @ (256,256)bf16
        h2 = jnp.dot(h1, w2_ref[...], preferred_element_type=jnp.float32)
        h2 = jnp.maximum(h2 + b2_ref[...], 0.0).astype(jnp.bfloat16)

        # Layer 3: (tm,256)bf16 @ (256,out_pad)bf16 -> f32 acc, bias in f32
        h3 = jnp.dot(h2, w3_ref[...], preferred_element_type=jnp.float32)
        h3 = h3 + b3_ref[...]

        # Drop padded columns BEFORE the (EUP-bound) tanh and the store, so the
        # output array / writeback is exactly (tm, out_dim).  Static slice.
        if out_dim != out_pad:
            h3 = h3[:, :out_dim]

        # bf16 tanh epilogue on v6e/v7x (bf16 EUP path); f32 on older chips.
        if bf16_epilogue:
            h3 = h3.astype(jnp.bfloat16)
        out_ref[...] = jnp.tanh(h3).astype(out_ref.dtype)

    return kernel


# -----------------------------------------------------------------------------
# One-time packing: pad + cast weights so repeated sampling calls reuse them.
# -----------------------------------------------------------------------------
def prepare_params(params, image_size, channels):
    """params: f32 (w1,b1,w2,b2,w3,b3) at PyTorch shapes -> padded bf16/f32."""
    w1, b1, w2, b2, w3, b3 = params
    out_dim = channels * image_size * image_size
    out_pad = _round_up(out_dim, 128)

    w1p = jnp.zeros((LATENT_PAD, HIDDEN), jnp.bfloat16)
    w1p = w1p.at[:LATENT_DIM, :].set(w1.astype(jnp.bfloat16))
    b1p = b1.reshape(1, HIDDEN).astype(jnp.float32)

    w2p = w2.astype(jnp.bfloat16)
    b2p = b2.reshape(1, HIDDEN).astype(jnp.float32)

    w3p = jnp.zeros((HIDDEN, out_pad), jnp.bfloat16)
    w3p = w3p.at[:, :out_dim].set(w3.astype(jnp.bfloat16))
    b3p = jnp.zeros((1, out_pad), jnp.float32)
    b3p = b3p.at[:, :out_dim].set(b3.reshape(1, out_dim).astype(jnp.float32))

    return (w1p, b1p, w2p, b2p, w3p, b3p)


# -----------------------------------------------------------------------------
# Batch-tile heuristic:
#   * sublane-aligned (multiple of 8),
#   * at least 2 grid steps when the batch allows it (v7x 2-TC sharding),
#   * cap 512 rows (per-step overhead amortized, good HBM-roofline tiles),
#   * minimize batch-padding waste,
#   * VMEM scaling guard for very large out_pad.
# -----------------------------------------------------------------------------
def _choose_tm(n, out_pad):
    n8 = _round_up(max(n, 1), 8)
    if n8 <= 8:
        tm = 8
    else:
        tm = min(_round_up(-(-n8 // 2), 8), 512)
    # Double-buffered bf16 z + bf16 out tiles kept ~<= 24 MiB of VMEM.
    bytes_per_row = 2 * 2 * (LATENT_PAD + out_pad)
    tm_cap = max(8, ((24 << 20) // bytes_per_row) // 8 * 8)
    return min(tm, tm_cap)


# -----------------------------------------------------------------------------
# Forward wrapper: pad batch/latent, run the gridded pallas_call, NCHW reshape.
# -----------------------------------------------------------------------------
def generator_forward(z, prepared, image_size, channels, *, tm=None,
                      out_dtype=jnp.bfloat16, bf16_epilogue=None):
    """z: (N, 100) f32 -> (N, channels, image_size, image_size) `out_dtype`."""
    w1p, b1p, w2p, b2p, w3p, b3p = prepared
    n = z.shape[0]
    out_dim = channels * image_size * image_size
    out_pad = w3p.shape[1]

    if bf16_epilogue is None:
        bf16_epilogue = _default_bf16_epilogue()
    if tm is None:
        tm = _choose_tm(n, out_pad)
    n_pad = _round_up(n, tm)

    # Latent pad (100 -> 128) + bf16 cast; tiny (~400 B/sample) one-shot pass.
    zp = jnp.zeros((n_pad, LATENT_PAD), jnp.bfloat16)
    zp = zp.at[:n, :LATENT_DIM].set(z.astype(jnp.bfloat16))

    grid = (n_pad // tm,)
    const = lambda i: (0, 0)          # weights / biases: same block every step

    flat = pl.pallas_call(
        _make_kernel(out_dim, out_pad, bf16_epilogue),
        # Output emitted at the TRUE feature width: no post-kernel column slice.
        out_shape=jax.ShapeDtypeStruct((n_pad, out_dim), out_dtype),
        grid_spec=pltpu.PrefetchScalarGridSpec(
            num_scalar_prefetch=0,
            grid=grid,
            in_specs=[
                pl.BlockSpec((tm, LATENT_PAD), lambda i: (i, 0)),   # z tile
                pl.BlockSpec((LATENT_PAD, HIDDEN), const),          # w1
                pl.BlockSpec((1, HIDDEN), const),                   # b1
                pl.BlockSpec((HIDDEN, HIDDEN), const),              # w2
                pl.BlockSpec((1, HIDDEN), const),                   # b2
                pl.BlockSpec((HIDDEN, out_pad), const),             # w3
                pl.BlockSpec((1, out_pad), const),                  # b3
            ],
            # Last block dim == full array dim (allowed even when not a
            # multiple of 128); only the last vreg per row is a masked store.
            out_specs=pl.BlockSpec((tm, out_dim), lambda i: (i, 0)),
        ),
        compiler_params=pltpu.CompilerParams(
            dimension_semantics=("parallel",),        # 2-TC sharding on v7x
            vmem_limit_bytes=48 * 1024 * 1024,
        ),
    )(zp, w1p, b1p, w2p, b2p, w3p, b3p)

    # Only the (rare) batch padding needs dropping; NCHW reshape is layout-free.
    if n_pad != n:
        flat = flat[:n]
    return flat.reshape(n, channels, image_size, image_size)


# -----------------------------------------------------------------------------
# Deterministic parameter init (nn.Linear-style uniform(-1/sqrt(fan_in), +...)).
# -----------------------------------------------------------------------------
def init_params(key, image_size, channels):
    out_dim = channels * image_size * image_size
    dims = [(LATENT_DIM, HIDDEN), (HIDDEN, HIDDEN), (HIDDEN, out_dim)]
    params = []
    for (fan_in, fan_out) in dims:
        key, kw, kb = jax.random.split(key, 3)
        bound = 1.0 / math.sqrt(fan_in)
        w = jax.random.uniform(kw, (fan_in, fan_out), jnp.float32, -bound, bound)
        b = jax.random.uniform(kb, (1, fan_out), jnp.float32, -bound, bound)
        params += [w, b]
    return tuple(params)


def _reference(z, params, image_size, channels):
    w1, b1, w2, b2, w3, b3 = params
    h = jnp.maximum(z @ w1 + b1, 0.0)
    h = jnp.maximum(h @ w2 + b2, 0.0)
    out = jnp.tanh(h @ w3 + b3)
    return out.reshape(z.shape[0], channels, image_size, image_size)


if __name__ == "__main__":
    key = jax.random.PRNGKey(0)

    # Config 1: PyTorch defaults (28x28x1 -> out_dim=784, padded to 896 inside
    #           the kernel only), batch 8 -> single grid step, no batch pad.
    # Config 2: aligned out_dim (16x16x1 -> 256), ragged batch 20 -> tm=16,
    #           grid=(2,) ("parallel" axis with >1 step) + batch-pad drop path.
    for image_size, channels, batch in ((28, 1, 8), (16, 1, 20)):
        key, kp, kz = jax.random.split(key, 3)
        params = init_params(kp, image_size, channels)
        z = jax.random.normal(kz, (batch, LATENT_DIM), jnp.float32)

        prepared = prepare_params(params, image_size, channels)
        out = generator_forward(z, prepared, image_size, channels)
        out = jax.block_until_ready(out)

        assert out.shape == (batch, channels, image_size, image_size), out.shape
        assert out.dtype == jnp.bfloat16, out.dtype

        out_f32 = out.astype(jnp.float32)
        assert bool(jnp.all(jnp.abs(out_f32) <= 1.0 + 1e-6))

        # bf16 matmuls/storage with f32 accumulation -> relaxed tolerance.
        ref = _reference(z, params, image_size, channels)
        assert bool(jnp.allclose(out_f32, ref, atol=2e-2, rtol=2e-2)), (
            float(jnp.max(jnp.abs(out_f32 - ref))))

    print("KERNEL_OK")
</pallas_src>

<mosaic_0001>
module attributes {stable_mosaic.version = 11 : i64} {
  func.func @kernel(%arg0: i32, %arg1: memref<8x128xbf16, #tpu.memory_space<vmem>>, %arg2: memref<128x256xbf16, #tpu.memory_space<vmem>>, %arg3: memref<1x256xf32, #tpu.memory_space<vmem>>, %arg4: memref<256x256xbf16, #tpu.memory_space<vmem>>, %arg5: memref<1x256xf32, #tpu.memory_space<vmem>>, %arg6: memref<256x896xbf16, #tpu.memory_space<vmem>>, %arg7: memref<1x896xf32, #tpu.memory_space<vmem>>, %arg8: memref<8x784xbf16, #tpu.memory_space<vmem>>) attributes {dimension_semantics = [#tpu.dimension_semantics<parallel>], iteration_bounds = array<i64: 1>, scalar_prefetch = 0 : i64, scratch_operands = 0 : i64, tpu.core_type = #tpu.core_type<tc>, window_params = [{transform_indices = @transform_0, window_bounds = array<i64: 8, 128>}, {pipeline_mode = #tpu.pipeline_mode<synchronous>, transform_indices = @transform_1, window_bounds = array<i64: 128, 256>}, {pipeline_mode = #tpu.pipeline_mode<synchronous>, transform_indices = @transform_2, window_bounds = array<i64: 1, 256>}, {pipeline_mode = #tpu.pipeline_mode<synchronous>, transform_indices = @transform_3, window_bounds = array<i64: 256, 256>}, {pipeline_mode = #tpu.pipeline_mode<synchronous>, transform_indices = @transform_4, window_bounds = array<i64: 1, 256>}, {pipeline_mode = #tpu.pipeline_mode<synchronous>, transform_indices = @transform_5, window_bounds = array<i64: 256, 896>}, {pipeline_mode = #tpu.pipeline_mode<synchronous>, transform_indices = @transform_6, window_bounds = array<i64: 1, 896>}, {transform_indices = @transform_7, window_bounds = array<i64: 8, 784>}]} {
    %c0 = arith.constant 0 : index
    %c0_0 = arith.constant 0 : index
    %0 = vector.load %arg1[%c0, %c0_0] : memref<8x128xbf16, #tpu.memory_space<vmem>>, vector<8x128xbf16>
    %c0_1 = arith.constant 0 : index
    %c0_2 = arith.constant 0 : index
    %1 = vector.load %arg2[%c0_1, %c0_2] : memref<128x256xbf16, #tpu.memory_space<vmem>>, vector<128x256xbf16>
    %cst = arith.constant dense<0.000000e+00> : vector<8x256xf32>
    %2 = tpu.matmul %0, %1, %cst {dimension_numbers = #tpu.dot_dimension_numbers<[1], [0], [0], [1], [0, 0, 1, 1], [], []>} : vector<8x128xbf16>, vector<128x256xbf16>, vector<8x256xf32> -> vector<8x256xf32>
    %c0_3 = arith.constant 0 : index
    %c0_4 = arith.constant 0 : index
    %3 = vector.load %arg3[%c0_3, %c0_4] : memref<1x256xf32, #tpu.memory_space<vmem>>, vector<1x256xf32>
    %4 = vector.broadcast %3 : vector<1x256xf32> to vector<8x256xf32>
    %5 = arith.addf %2, %4 : vector<8x256xf32>
    %cst_5 = arith.constant 0.000000e+00 : f32
    %6 = vector.broadcast %cst_5 : f32 to vector<8x256xf32>
    %7 = arith.maximumf %5, %6 : vector<8x256xf32>
    %8 = arith.truncf %7 : vector<8x256xf32> to vector<8x256xbf16>
    %c0_6 = arith.constant 0 : index
    %c0_7 = arith.constant 0 : index
    %9 = vector.load %arg4[%c0_6, %c0_7] : memref<256x256xbf16, #tpu.memory_space<vmem>>, vector<256x256xbf16>
    %cst_8 = arith.constant dense<0.000000e+00> : vector<8x256xf32>
    %10 = tpu.matmul %8, %9, %cst_8 {dimension_numbers = #tpu.dot_dimension_numbers<[1], [0], [0], [1], [0, 0, 1, 1], [], []>} : vector<8x256xbf16>, vector<256x256xbf16>, vector<8x256xf32> -> vector<8x256xf32>
    %c0_9 = arith.constant 0 : index
    %c0_10 = arith.constant 0 : index
    %11 = vector.load %arg5[%c0_9, %c0_10] : memref<1x256xf32, #tpu.memory_space<vmem>>, vector<1x256xf32>
    %12 = vector.broadcast %11 : vector<1x256xf32> to vector<8x256xf32>
    %13 = arith.addf %10, %12 : vector<8x256xf32>
    %cst_11 = arith.constant 0.000000e+00 : f32
    %14 = vector.broadcast %cst_11 : f32 to vector<8x256xf32>
    %15 = arith.maximumf %13, %14 : vector<8x256xf32>
    %16 = arith.truncf %15 : vector<8x256xf32> to vector<8x256xbf16>
    %c0_12 = arith.constant 0 : index
    %c0_13 = arith.constant 0 : index
    %17 = vector.load %arg6[%c0_12, %c0_13] : memref<256x896xbf16, #tpu.memory_space<vmem>>, vector<256x896xbf16>
    %cst_14 = arith.constant dense<0.000000e+00> : vector<8x896xf32>
    %18 = tpu.matmul %16, %17, %cst_14 {dimension_numbers = #tpu.dot_dimension_numbers<[1], [0], [0], [1], [0, 0, 1, 1], [], []>} : vector<8x256xbf16>, vector<256x896xbf16>, vector<8x896xf32> -> vector<8x896xf32>
    %c0_15 = arith.constant 0 : index
    %c0_16 = arith.constant 0 : index
    %19 = vector.load %arg7[%c0_15, %c0_16] : memref<1x896xf32, #tpu.memory_space<vmem>>, vector<1x896xf32>
    %20 = vector.broadcast %19 : vector<1x896xf32> to vector<8x896xf32>
    %21 = arith.addf %18, %20 : vector<8x896xf32>
    %22 = vector.extract_strided_slice %21 {offsets = [0, 0], sizes = [8, 784], strides = [1, 1]} : vector<8x896xf32> to vector<8x784xf32>
    %23 = arith.truncf %22 : vector<8x784xf32> to vector<8x784xbf16>
    %24 = math.tanh %23 : vector<8x784xbf16>
    %c0_17 = arith.constant 0 : index
    %c0_18 = arith.constant 0 : index
    %25 = vector.load %arg8[%c0_17, %c0_18] : memref<8x784xbf16, #tpu.memory_space<vmem>>, vector<8x784xbf16>
    tpu.vector_store %arg8[%c0_17, %c0_18], %24 {strides = array<i32>} : memref<8x784xbf16, #tpu.memory_space<vmem>>, vector<8x784xbf16>,
    return
  }
  func.func @transform_0(%arg0: i32) -> (i32, i32) {
    %c0_i32 = arith.constant 0 : i32
    %c0_i32_0 = arith.constant 0 : i32
    return %arg0, %c0_i32 : i32, i32
  }
  func.func @transform_1(%arg0: i32) -> (i32, i32) {
    %c0_i32 = arith.constant 0 : i32
    %c0_i32_0 = arith.constant 0 : i32
    %c0_i32_1 = arith.constant 0 : i32
    return %c0_i32, %c0_i32_0 : i32, i32
  }
  func.func @transform_2(%arg0: i32) -> (i32, i32) {
    %c0_i32 = arith.constant 0 : i32
    %c0_i32_0 = arith.constant 0 : i32
    %c0_i32_1 = arith.constant 0 : i32
    return %c0_i32, %c0_i32_0 : i32, i32
  }
  func.func @transform_3(%arg0: i32) -> (i32, i32) {
    %c0_i32 = arith.constant 0 : i32
    %c0_i32_0 = arith.constant 0 : i32
    %c0_i32_1 = arith.constant 0 : i32
    return %c0_i32, %c0_i32_0 : i32, i32
  }
  func.func @transform_4(%arg0: i32) -> (i32, i32) {
    %c0_i32 = arith.constant 0 : i32
    %c0_i32_0 = arith.constant 0 : i32
    %c0_i32_1 = arith.constant 0 : i32
    return %c0_i32, %c0_i32_0 : i32, i32
  }
  func.func @transform_5(%arg0: i32) -> (i32, i32) {
    %c0_i32 = arith.constant 0 : i32
    %c0_i32_0 = arith.constant 0 : i32
    %c0_i32_1 = arith.constant 0 : i32
    return %c0_i32, %c0_i32_0 : i32, i32
  }
  func.func @transform_6(%arg0: i32) -> (i32, i32) {
    %c0_i32 = arith.constant 0 : i32
    %c0_i32_0 = arith.constant 0 : i32
    %c0_i32_1 = arith.constant 0 : i32
    return %c0_i32, %c0_i32_0 : i32, i32
  }
  func.func @transform_7(%arg0: i32) -> (i32, i32) {
    %c0_i32 = arith.constant 0 : i32
    %c0_i32_0 = arith.constant 0 : i32
    return %arg0, %c0_i32 : i32, i32
  }
}

</mosaic_0001>

<llo_original>
// kernel: tpu_custom_call.1
$region0: #{tpu_custom_call.1}
  #allocation0 [shape = 'u32[]', space=smem, size = 0x4, offset = 0x4, fixed_abs, tag = 'smem constant byte address 0x4 - core index']
  #allocation1 [shape = 'u32[144,128]{1,0:T(1,128)}', space=vmem, size = 0x12000, scoped, tag = 'internal scratch']
  %s0 = inlined_call_operand.hbm [shape: bf16[8,128], index: 0, kind: input, shape index: {}]
  %s1 = inlined_call_operand.hbm [shape: bf16[128,256], index: 1, kind: input, shape index: {}]
  %s2 = inlined_call_operand.vmem [shape: f32[1,256], index: 2, kind: input, shape index: {}]
  %s3 = inlined_call_operand.hbm [shape: bf16[256,256], index: 3, kind: input, shape index: {}]
  %s4 = inlined_call_operand.hbm [shape: f32[1,256], index: 4, kind: input, shape index: {}]
  %s5 = inlined_call_operand.hbm [shape: bf16[256,896], index: 5, kind: input, shape index: {}]
  %s6 = inlined_call_operand.vmem [shape: f32[1,896], index: 6, kind: input, shape index: {}]
  %s7 = inlined_call_operand.hbm [shape: bf16[8,784], index: 7, kind: output, shape index: {}]
  %s8 = sld [smem:[#allocation0]]
  $region58: #{tpu_custom_call.1} parent=0
    _
  %s10 = ssub.s32 1, %s8
  %s11 = scalar_select 0, %s10, %s8
  $region1: #{tpu_custom_call.1} parent=0
    #allocation2 [shape = 'u8[2048]{0}', space=vmem, size = 0x800, scoped, tag = 'input window, operand 0, single buffered']
    #allocation3 [shape = 's32[1]{0}', space=sflag, size = 0x4, scoped, tag = 'scoped memory for tpu_custom_call.1']
    #allocation4 [shape = 's32[1]{0}', space=sflag, size = 0x4, scoped, tag = 'scoped memory for tpu_custom_call.1']
    #allocation5 [shape = 'u8[65536]{0}', space=vmem, size = 0x10000, scoped, tag = 'input window, operand 1, single buffered']
    #allocation6 [shape = 's32[1]{0}', space=sflag, size = 0x4, scoped, tag = 'scoped memory for tpu_custom_call.1']
    #allocation7 [shape = 'u8[131072]{0}', space=vmem, size = 0x20000, scoped, tag = 'input window, operand 3, single buffered']
    #allocation8 [shape = 'u8[1024]{0}', space=vmem, size = 0x400, scoped, tag = 'input window, operand 4, single buffered']
    #allocation9 [shape = 's32[1]{0}', space=sflag, size = 0x4, scoped, tag = 'scoped memory for tpu_custom_call.1']
    #allocation10 [shape = 'u8[458752]{0}', space=vmem, size = 0x70000, scoped, tag = 'input window, operand 5, single buffered']
    #allocation11 [shape = 'u8[14336]{0}', space=vmem, size = 0x3800, scoped, tag = 'output window, operand 0, single buffered']
    %12 = vsyncpa [#allocation3], 0
    %13 = vsyncpa [#allocation6], 0
    %14 = vsyncpa [#allocation9], 0
    %15 = vsyncpa [#allocation4], 0
    // Predicated region
    $region2: #{tpu_custom_call.1} parent=1 // pred_check
      _
    $region3: #{tpu_custom_call.1} parent=1 // pred_check_branch
      %17 = sbr.rel (0) target = $region5
    $region4: #{tpu_custom_call.1} parent=1 // pred_region
      %s19 = ssub.s32 64, 64
      %20 = vsyncadd [#allocation3], %s19
      %s22 = sshll.u32 [#allocation2], 4
      %s23 = int_to_ptr.vmem [resolvable:$true] %s22
      %25 = dma.hbm_to_vmem [thread:$0]  %s0, 64, %s23, [#allocation3]
    $region5: #{tpu_custom_call.1} parent=1 // pred_fallthru
      _
    // Predicated region
    $region6: #{tpu_custom_call.1} parent=1 // pred_check
      _
    $region7: #{tpu_custom_call.1} parent=1 // pred_check_branch
      %27 = sbr.rel (0) target = $region9
    $region8: #{tpu_custom_call.1} parent=1 // pred_region
      %s29 = ssub.s32 2048, 2048
      %30 = vsyncadd [#allocation6], %s29
      %s31 = sshll.u32 [#allocation5], 4
      %s32 = int_to_ptr.vmem [resolvable:$true] %s31
      %37 = dma.hbm_to_vmem [thread:$0]  %s1, 2048, %s32, [#allocation6], 128, 128, 8
    $region9: #{tpu_custom_call.1} parent=1 // pred_fallthru
      _
    // Predicated region
    $region10: #{tpu_custom_call.1} parent=1 // pred_check
      _
    $region11: #{tpu_custom_call.1} parent=1 // pred_check_branch
      %39 = sbr.rel (0) target = $region13
    $region12: #{tpu_custom_call.1} parent=1 // pred_region
      _
    $region13: #{tpu_custom_call.1} parent=1 // pred_fallthru
      _
    // Predicated region
    $region14: #{tpu_custom_call.1} parent=1 // pred_check
      _
    $region15: #{tpu_custom_call.1} parent=1 // pred_check_branch
      %41 = sbr.rel (0) target = $region17
    $region16: #{tpu_custom_call.1} parent=1 // pred_region
      %s43 = ssub.s32 4096, 4096
      %44 = vsyncadd [#allocation6], %s43
      %s45 = sshll.u32 [#allocation7], 4
      %s46 = int_to_ptr.vmem [resolvable:$true] %s45
      %51 = dma.hbm_to_vmem [thread:$0]  %s3, 4096, %s46, [#allocation6], 128, 128, 8
    $region17: #{tpu_custom_call.1} parent=1 // pred_fallthru
      _
    // Predicated region
    $region18: #{tpu_custom_call.1} parent=1 // pred_check
      _
    $region19: #{tpu_custom_call.1} parent=1 // pred_check_branch
      %53 = sbr.rel (0) target = $region21
    $region20: #{tpu_custom_call.1} parent=1 // pred_region
      %s55 = ssub.s32 32, 32
      %56 = vsyncadd [#allocation9], %s55
      %s58 = sshll.u32 [#allocation8], 4
      %s59 = int_to_ptr.vmem [resolvable:$true] %s58
      %61 = dma.hbm_to_vmem [thread:$0]  %s4, 32, %s59, [#allocation9]
    $region21: #{tpu_custom_call.1} parent=1 // pred_fallthru
      _
    // Predicated region
    $region22: #{tpu_custom_call.1} parent=1 // pred_check
      _
    $region23: #{tpu_custom_call.1} parent=1 // pred_check_branch
      %63 = sbr.rel (0) target = $region25
    $region24: #{tpu_custom_call.1} parent=1 // pred_region
      %s65 = ssub.s32 14336, 14336
      %66 = vsyncadd [#allocation9], %s65
      %s67 = sshll.u32 [#allocation10], 4
      %s68 = int_to_ptr.vmem [resolvable:$true] %s67
      %73 = dma.hbm_to_vmem [thread:$0]  %s5, 14336, %s68, [#allocation9], 448, 448, 28
    $region25: #{tpu_custom_call.1} parent=1 // pred_fallthru
      _
    // Predicated region
    $region26: #{tpu_custom_call.1} parent=1 // pred_check
      _
    $region27: #{tpu_custom_call.1} parent=1 // pred_check_branch
      %75 = sbr.rel (0) target = $region29
    $region28: #{tpu_custom_call.1} parent=1 // pred_region
      _
    $region29: #{tpu_custom_call.1} parent=1 // pred_fallthru
      _
    // Predicated region
    $region30: #{tpu_custom_call.1} parent=1 // pred_check
      _
    $region31: #{tpu_custom_call.1} parent=1 // pred_check_branch
      %77 = sbr.rel (0) target = $region33
    $region32: #{tpu_custom_call.1} parent=1 // pred_region
      %78 = dma.done [#allocation3], 64
    $region33: #{tpu_custom_call.1} parent=1 // pred_fallthru
      _
    // Predicated region
    $region34: #{tpu_custom_call.1} parent=1 // pred_check
      _
    $region35: #{tpu_custom_call.1} parent=1 // pred_check_branch
      %80 = sbr.rel (0) target = $region37
    $region36: #{tpu_custom_call.1} parent=1 // pred_region
      %81 = dma.done [#allocation6], 2048
    $region37: #{tpu_custom_call.1} parent=1 // pred_fallthru
      _
    // Predicated region
    $region38: #{tpu_custom_call.1} parent=1 // pred_check
      _
    $region39: #{tpu_custom_call.1} parent=1 // pred_check_branch
      %83 = sbr.rel (0) target = $region41
    $region40: #{tpu_custom_call.1} parent=1 // pred_region
      %84 = dma.done [#allocation6], 4096
    $region41: #{tpu_custom_call.1} parent=1 // pred_fallthru
      _
    // Predicated region
    $region42: #{tpu_custom_call.1} parent=1 // pred_check
      _
    $region43: #{tpu_custom_call.1} parent=1 // pred_check_branch
      %86 = sbr.rel (0) target = $region45
    $region44: #{tpu_custom_call.1} parent=1 // pred_region
      %87 = dma.done [#allocation9], 32
    $region45: #{tpu_custom_call.1} parent=1 // pred_fallthru
      _
    // Predicated region
    $region46: #{tpu_custom_call.1} parent=1 // pred_check
      _
    $region47: #{tpu_custom_call.1} parent=1 // pred_check_branch
      %89 = sbr.rel (0) target = $region49
    $region48: #{tpu_custom_call.1} parent=1 // pred_region
      %90 = dma.done [#allocation9], 14336
    $region49: #{tpu_custom_call.1} parent=1 // pred_fallthru
      _
    %v92 = vld [vmem:[#allocation2] sm:$0xf]
    %v93 = vld [vmem:[#allocation5] sm:$0xff]
    %v94 = vld [vmem:[#allocation5 + $0x8] sm:$0xff]
    %v95 = vld [vmem:[#allocation5 + $0x10] sm:$0xff]
    %v96 = vld [vmem:[#allocation5 + $0x18] sm:$0xff]
    %v97 = vld [vmem:[#allocation5 + $0x20] sm:$0xff]
    %v98 = vld [vmem:[#allocation5 + $0x28] sm:$0xff]
    %v99 = vld [vmem:[#allocation5 + $0x30] sm:$0xff]
    %v100 = vld [vmem:[#allocation5 + $0x38] sm:$0xff]
    %v101 = vld [vmem:[#allocation5 + $0x40] sm:$0xff]
    %v102 = vld [vmem:[#allocation5 + $0x48] sm:$0xff]
    %v103 = vld [vmem:[#allocation5 + $0x50] sm:$0xff]
    %v104 = vld [vmem:[#allocation5 + $0x58] sm:$0xff]
    %v105 = vld [vmem:[#allocation5 + $0x60] sm:$0xff]
    %v106 = vld [vmem:[#allocation5 + $0x68] sm:$0xff]
    %v107 = vld [vmem:[#allocation5 + $0x70] sm:$0xff]
    %v108 = vld [vmem:[#allocation5 + $0x78] sm:$0xff]
    %v109 = vld [vmem:[%s2] sm:$0x3]
    %v111 = vlaneseq
    %v112 = vshrl.u32 %v111, 7
    %v113 = vsub.s32 0, %v112
    %v114 = vrot.slane %v109, %v113
    %v115 = vlaneseq
    %v116 = vshrl.u32 %v115, 7
    %v117 = vsub.s32 1, %v116
    %v118 = vrot.slane %v109, %v117
    %v137 = vunpack.c.l.b16 %v93
    %v138 = vunpack.c.h.b16 %v93
    %v139 = vunpack.c.l.b16 %v94
    %v140 = vunpack.c.h.b16 %v94
    %v141 = vunpack.c.l.b16 %v95
    %v142 = vunpack.c.h.b16 %v95
    %v143 = vunpack.c.l.b16 %v96
    %v144 = vunpack.c.h.b16 %v96
    %v145 = vunpack.c.l.b16 %v97
    %v146 = vunpack.c.h.b16 %v97
    %v147 = vunpack.c.l.b16 %v98
    %v148 = vunpack.c.h.b16 %v98
    %v149 = vunpack.c.l.b16 %v99
    %v150 = vunpack.c.h.b16 %v99
    %v151 = vunpack.c.l.b16 %v100
    %v152 = vunpack.c.h.b16 %v100
    %v153 = vunpack.c.l.b16 %v101
    %v154 = vunpack.c.h.b16 %v101
    %v155 = vunpack.c.l.b16 %v102
    %v156 = vunpack.c.h.b16 %v102
    %v157 = vunpack.c.l.b16 %v103
    %v158 = vunpack.c.h.b16 %v103
    %v159 = vunpack.c.l.b16 %v104
    %v160 = vunpack.c.h.b16 %v104
    %v161 = vunpack.c.l.b16 %v105
    %v162 = vunpack.c.h.b16 %v105
    %v163 = vunpack.c.l.b16 %v106
    %v164 = vunpack.c.h.b16 %v106
    %v165 = vunpack.c.l.b16 %v107
    %v166 = vunpack.c.h.b16 %v107
    %v167 = vunpack.c.l.b16 %v108
    %v168 = vunpack.c.h.b16 %v108
    %v169 = vpack.c.b16 %v139, %v137
    %v170 = vpack.c.b16 %v140, %v138
    %v171 = vpack.c.b16 %v143, %v141
    %v172 = vpack.c.b16 %v144, %v142
    %v173 = vpack.c.b16 %v147, %v145
    %v174 = vpack.c.b16 %v148, %v146
    %v175 = vpack.c.b16 %v151, %v149
    %v176 = vpack.c.b16 %v152, %v150
    %v177 = vpack.c.b16 %v155, %v153
    %v178 = vpack.c.b16 %v156, %v154
    %v179 = vpack.c.b16 %v159, %v157
    %v180 = vpack.c.b16 %v160, %v158
    %v181 = vpack.c.b16 %v163, %v161
    %v182 = vpack.c.b16 %v164, %v162
    %v183 = vpack.c.b16 %v167, %v165
    %v184 = vpack.c.b16 %v168, %v166
    %201 = vmatprep.subr.bf16.mxu0 %v184
    %202 = vmatpush1.bf16.msra.mxu0 %v183
    %203 = vmatprep.subr.bf16.mxu0 %v182
    %204 = vmatpush1.bf16.msra.mxu0 %v181
    %205 = vmatprep.subr.bf16.mxu0 %v180
    %206 = vmatpush1.bf16.msra.mxu0 %v179
    %207 = vmatprep.subr.bf16.mxu0 %v178
    %208 = vmatpush1.bf16.msra.mxu0 %v177
    %209 = vmatprep.subr.bf16.mxu0 %v176
    %210 = vmatpush1.bf16.msra.mxu0 %v175
    %211 = vmatprep.subr.bf16.mxu0 %v174
    %212 = vmatpush1.bf16.msra.mxu0 %v173
    %213 = vmatprep.subr.bf16.mxu0 %v172
    %214 = vmatpush1.bf16.msra.mxu0 %v171
    %215 = vmatprep.subr.bf16.mxu0 %v170
    %216 = vmatpush1.bf16.msra.mxu0 %v169
    %217 = vmatprep.subr.bf16.mxu0 0
    %218 = vmatpush2.bf16.msra.mxu0 0
    %219 = vmatprep.subr.bf16.mxu0 0
    %220 = vmatpush2.bf16.msra.mxu0 0
    %221 = vmatprep.subr.bf16.mxu0 0
    %222 = vmatpush2.bf16.msra.mxu0 0
    %223 = vmatprep.subr.bf16.mxu0 0
    %224 = vmatpush2.bf16.msra.mxu0 0
    %225 = vmatprep.subr.bf16.mxu0 0
    %226 = vmatpush2.bf16.msra.mxu0 0
    %227 = vmatprep.subr.bf16.mxu0 0
    %228 = vmatpush2.bf16.msra.mxu0 0
    %229 = vmatprep.subr.bf16.mxu0 0
    %230 = vmatpush2.bf16.msra.mxu0 0
    %231 = vmatprep.subr.bf16.mxu0 0
    %232 = vmatpush2.bf16.msra.mxu0 0
    %233 = vmatprep.mubr.bf16.mxu0 0
    %234 = vmatmul.mubr.bf16.gmra.mxu0 %v92
    %v235 = vpop.f32.mrf.mxu0
    %v236 = vadd.f32 %v114, %v235
    %v237 = vpop.f32.mrf.mxu0
    %v238 = vadd.f32 %v118, %v237
    %v239 = vpop.f32.mrf.mxu0
    %v240 = vpop.f32.mrf.mxu0
    %241 = vdwg.mxu0
    %v242 = vmax.f32 %v236, 0.0
    %v243 = vmax.f32 %v238, 0.0
    %v244 = vpack.c.bf16 %v242, %v242
    %v245 = vpack.c.bf16 %v243, %v243
    %v246 = vld [vmem:[#allocation7] sm:$0xff]
    %v247 = vld [vmem:[#allocation7 + $0x8] sm:$0xff]
    %v248 = vld [vmem:[#allocation7 + $0x10] sm:$0xff]
    %v249 = vld [vmem:[#allocation7 + $0x18] sm:$0xff]
    %v250 = vld [vmem:[#allocation7 + $0x20] sm:$0xff]
    %v251 = vld [vmem:[#allocation7 + $0x28] sm:$0xff]
    %v252 = vld [vmem:[#allocation7 + $0x30] sm:$0xff]
    %v253 = vld [vmem:[#allocation7 + $0x38] sm:$0xff]
    %v254 = vld [vmem:[#allocation7 + $0x40] sm:$0xff]
    %v255 = vld [vmem:[#allocation7 + $0x48] sm:$0xff]
    %v256 = vld [vmem:[#allocation7 + $0x50] sm:$0xff]
    %v257 = vld [vmem:[#allocation7 + $0x58] sm:$0xff]
    %v258 = vld [vmem:[#allocation7 + $0x60] sm:$0xff]
    %v259 = vld [vmem:[#allocation7 + $0x68] sm:$0xff]
    %v260 = vld [vmem:[#allocation7 + $0x70] sm:$0xff]
    %v261 = vld [vmem:[#allocation7 + $0x78] sm:$0xff]
    %v262 = vld [vmem:[#allocation7 + $0x80] sm:$0xff]
    %v263 = vld [vmem:[#allocation7 + $0x88] sm:$0xff]
    %v264 = vld [vmem:[#allocation7 + $0x90] sm:$0xff]
    %v265 = vld [vmem:[#allocation7 + $0x98] sm:$0xff]
    %v266 = vld [vmem:[#allocation7 + $0xa0] sm:$0xff]
    %v267 = vld [vmem:[#allocation7 + $0xa8] sm:$0xff]
    %v268 = vld [vmem:[#allocation7 + $0xb0] sm:$0xff]
    %v269 = vld [vmem:[#allocation7 + $0xb8] sm:$0xff]
    %v270 = vld [vmem:[#allocation7 + $0xc0] sm:$0xff]
    %v271 = vld [vmem:[#allocation7 + $0xc8] sm:$0xff]
    %v272 = vld [vmem:[#allocation7 + $0xd0] sm:$0xff]
    %v273 = vld [vmem:[#allocation7 + $0xd8] sm:$0xff]
    %v274 = vld [vmem:[#allocation7 + $0xe0] sm:$0xff]
    %v275 = vld [vmem:[#allocation7 + $0xe8] sm:$0xff]
    %v276 = vld [vmem:[#allocation7 + $0xf0] sm:$0xff]
    %v277 = vld [vmem:[#allocation7 + $0xf8] sm:$0xff]
    %v278 = vld [vmem:[#allocation8] sm:$0x3]
    %v280 = vlaneseq
    %v281 = vshrl.u32 %v280, 7
    %v282 = vsub.s32 0, %v281
    %v283 = vrot.slane %v278, %v282
    %v284 = vlaneseq
    %v285 = vshrl.u32 %v284, 7
    %v286 = vsub.s32 1, %v285
    %v287 = vrot.slane %v278, %v286
    %v322 = vunpack.c.l.b16 %v246
    %v323 = vunpack.c.h.b16 %v246
    %v324 = vunpack.c.l.b16 %v247
    %v325 = vunpack.c.h.b16 %v247
    %v326 = vunpack.c.l.b16 %v248
    %v327 = vunpack.c.h.b16 %v248
    %v328 = vunpack.c.l.b16 %v249
    %v329 = vunpack.c.h.b16 %v249
    %v330 = vunpack.c.l.b16 %v250
    %v331 = vunpack.c.h.b16 %v250
    %v332 = vunpack.c.l.b16 %v251
    %v333 = vunpack.c.h.b16 %v251
    %v334 = vunpack.c.l.b16 %v252
    %v335 = vunpack.c.h.b16 %v252
    %v336 = vunpack.c.l.b16 %v253
    %v337 = vunpack.c.h.b16 %v253
    %v338 = vunpack.c.l.b16 %v254
    %v339 = vunpack.c.h.b16 %v254
    %v340 = vunpack.c.l.b16 %v255
    %v341 = vunpack.c.h.b16 %v255
    %v342 = vunpack.c.l.b16 %v256
    %v343 = vunpack.c.h.b16 %v256
    %v344 = vunpack.c.l.b16 %v257
    %v345 = vunpack.c.h.b16 %v257
    %v346 = vunpack.c.l.b16 %v258
    %v347 = vunpack.c.h.b16 %v258
    %v348 = vunpack.c.l.b16 %v259
    %v349 = vunpack.c.h.b16 %v259
    %v350 = vunpack.c.l.b16 %v260
    %v351 = vunpack.c.h.b16 %v260
    %v352 = vunpack.c.l.b16 %v261
    %v353 = vunpack.c.h.b16 %v261
    %v354 = vunpack.c.l.b16 %v262
    %v355 = vunpack.c.h.b16 %v262
    %v356 = vunpack.c.l.b16 %v263
    %v357 = vunpack.c.h.b16 %v263
    %v358 = vunpack.c.l.b16 %v264
    %v359 = vunpack.c.h.b16 %v264
    %v360 = vunpack.c.l.b16 %v265
    %v361 = vunpack.c.h.b16 %v265
    %v362 = vunpack.c.l.b16 %v266
    %v363 = vunpack.c.h.b16 %v266
    %v364 = vunpack.c.l.b16 %v267
    %v365 = vunpack.c.h.b16 %v267
    %v366 = vunpack.c.l.b16 %v268
    %v367 = vunpack.c.h.b16 %v268
    %v368 = vunpack.c.l.b16 %v269
    %v369 = vunpack.c.h.b16 %v269
    %v370 = vunpack.c.l.b16 %v270
    %v371 = vunpack.c.h.b16 %v270
    %v372 = vunpack.c.l.b16 %v271
    %v373 = vunpack.c.h.b16 %v271
    %v374 = vunpack.c.l.b16 %v272
    %v375 = vunpack.c.h.b16 %v272
    %v376 = vunpack.c.l.b16 %v273
    %v377 = vunpack.c.h.b16 %v273
    %v378 = vunpack.c.l.b16 %v274
    %v379 = vunpack.c.h.b16 %v274
    %v380 = vunpack.c.l.b16 %v275
    %v381 = vunpack.c.h.b16 %v275
    %v382 = vunpack.c.l.b16 %v276
    %v383 = vunpack.c.h.b16 %v276
    %v384 = vunpack.c.l.b16 %v277
    %v385 = vunpack.c.h.b16 %v277
    %v386 = vpack.c.b16 %v324, %v322
    %v387 = vpack.c.b16 %v325, %v323
    %v388 = vpack.c.b16 %v328, %v326
    %v389 = vpack.c.b16 %v329, %v327
    %v390 = vpack.c.b16 %v332, %v330
    %v391 = vpack.c.b16 %v333, %v331
    %v392 = vpack.c.b16 %v336, %v334
    %v393 = vpack.c.b16 %v337, %v335
    %v394 = vpack.c.b16 %v340, %v338
    %v395 = vpack.c.b16 %v341, %v339
    %v396 = vpack.c.b16 %v344, %v342
    %v397 = vpack.c.b16 %v345, %v343
    %v398 = vpack.c.b16 %v348, %v346
    %v399 = vpack.c.b16 %v349, %v347
    %v400 = vpack.c.b16 %v352, %v350
    %v401 = vpack.c.b16 %v353, %v351
    %v402 = vpack.c.b16 %v356, %v354
    %v403 = vpack.c.b16 %v357, %v355
    %v404 = vpack.c.b16 %v360, %v358
    %v405 = vpack.c.b16 %v361, %v359
    %v406 = vpack.c.b16 %v364, %v362
    %v407 = vpack.c.b16 %v365, %v363
    %v408 = vpack.c.b16 %v368, %v366
    %v409 = vpack.c.b16 %v369, %v367
    %v410 = vpack.c.b16 %v372, %v370
    %v411 = vpack.c.b16 %v373, %v371
    %v412 = vpack.c.b16 %v376, %v374
    %v413 = vpack.c.b16 %v377, %v375
    %v414 = vpack.c.b16 %v380, %v378
    %v415 = vpack.c.b16 %v381, %v379
    %v416 = vpack.c.b16 %v384, %v382
    %v417 = vpack.c.b16 %v385, %v383
    %450 = vmatprep.subr.bf16.mxu0 %v401
    %451 = vmatpush1.bf16.msra.mxu0 %v400
    %452 = vmatprep.subr.bf16.mxu0 %v399
    %453 = vmatpush1.bf16.msra.mxu0 %v398
    %454 = vmatprep.subr.bf16.mxu0 %v397
    %455 = vmatpush1.bf16.msra.mxu0 %v396
    %456 = vmatprep.subr.bf16.mxu0 %v395
    %457 = vmatpush1.bf16.msra.mxu0 %v394
    %458 = vmatprep.subr.bf16.mxu0 %v393
    %459 = vmatpush1.bf16.msra.mxu0 %v392
    %460 = vmatprep.subr.bf16.mxu0 %v391
    %461 = vmatpush1.bf16.msra.mxu0 %v390
    %462 = vmatprep.subr.bf16.mxu0 %v389
    %463 = vmatpush1.bf16.msra.mxu0 %v388
    %464 = vmatprep.subr.bf16.mxu0 %v387
    %465 = vmatpush1.bf16.msra.mxu0 %v386
    %466 = vmatprep.subr.bf16.mxu0 %v417
    %467 = vmatpush2.bf16.msra.mxu0 %v416
    %468 = vmatprep.subr.bf16.mxu0 %v415
    %469 = vmatpush2.bf16.msra.mxu0 %v414
    %470 = vmatprep.subr.bf16.mxu0 %v413
    %471 = vmatpush2.bf16.msra.mxu0 %v412
    %472 = vmatprep.subr.bf16.mxu0 %v411
    %473 = vmatpush2.bf16.msra.mxu0 %v410
    %474 = vmatprep.subr.bf16.mxu0 %v409
    %475 = vmatpush2.bf16.msra.mxu0 %v408
    %476 = vmatprep.subr.bf16.mxu0 %v407
    %477 = vmatpush2.bf16.msra.mxu0 %v406
    %478 = vmatprep.subr.bf16.mxu0 %v405
    %479 = vmatpush2.bf16.msra.mxu0 %v404
    %480 = vmatprep.subr.bf16.mxu0 %v403
    %481 = vmatpush2.bf16.msra.mxu0 %v402
    %482 = vmatprep.mubr.bf16.mxu0 %v245
    %483 = vmatmul.mubr.bf16.gmra.mxu0 %v244
    %v484 = vpop.f32.mrf.mxu0
    %v485 = vadd.f32 %v283, %v484
    %v486 = vpop.f32.mrf.mxu0
    %v487 = vadd.f32 %v287, %v486
    %v488 = vpop.f32.mrf.mxu0
    %v489 = vpop.f32.mrf.mxu0
    %490 = vdwg.mxu0
    %v491 = vmax.f32 %v485, 0.0
    %v492 = vmax.f32 %v487, 0.0
    %v493 = vpack.c.bf16 %v491, %v491
    %v494 = vpack.c.bf16 %v492, %v492
    %v495 = vld [vmem:[#allocation10] sm:$0xff]
    %v496 = vld [vmem:[#allocation10 + $0x8] sm:$0xff]
    %v497 = vld [vmem:[#allocation10 + $0x10] sm:$0xff]
    %v498 = vld [vmem:[#allocation10 + $0x18] sm:$0xf]
    %v499 = vld [vmem:[#allocation10 + $0x1c] sm:$0xff]
    %v500 = vld [vmem:[#allocation10 + $0x24] sm:$0xff]
    %v501 = vld [vmem:[#allocation10 + $0x2c] sm:$0xff]
    %v502 = vld [vmem:[#allocation10 + $0x34] sm:$0xf]
    %v503 = vld [vmem:[#allocation10 + $0x38] sm:$0xff]
    %v504 = vld [vmem:[#allocation10 + $0x40] sm:$0xff]
    %v505 = vld [vmem:[#allocation10 + $0x48] sm:$0xff]
    %v506 = vld [vmem:[#allocation10 + $0x50] sm:$0xf]
    %v507 = vld [vmem:[#allocation10 + $0x54] sm:$0xff]
    %v508 = vld [vmem:[#allocation10 + $0x5c] sm:$0xff]
    %v509 = vld [vmem:[#allocation10 + $0x64] sm:$0xff]
    %v510 = vld [vmem:[#allocation10 + $0x6c] sm:$0xf]
    %v511 = vld [vmem:[#allocation10 + $0x70] sm:$0xff]
    %v512 = vld [vmem:[#allocation10 + $0x78] sm:$0xff]
    %v513 = vld [vmem:[#allocation10 + $0x80] sm:$0xff]
    %v514 = vld [vmem:[#allocation10 + $0x88] sm:$0xf]
    %v515 = vld [vmem:[#allocation10 + $0x8c] sm:$0xff]
    %v516 = vld [vmem:[#allocation10 + $0x94] sm:$0xff]
    %v517 = vld [vmem:[#allocation10 + $0x9c] sm:$0xff]
    %v518 = vld [vmem:[#allocation10 + $0xa4] sm:$0xf]
    %v519 = vld [vmem:[#allocation10 + $0xa8] sm:$0xff]
    %v520 = vld [vmem:[#allocation10 + $0xb0] sm:$0xff]
    %v521 = vld [vmem:[#allocation10 + $0xb8] sm:$0xff]
    %v522 = vld [vmem:[#allocation10 + $0xc0] sm:$0xf]
    %v523 = vld [vmem:[#allocation10 + $0xc4] sm:$0xff]
    %v524 = vld [vmem:[#allocation10 + $0xcc] sm:$0xff]
    %v525 = vld [vmem:[#allocation10 + $0xd4] sm:$0xff]
    %v526 = vld [vmem:[#allocation10 + $0xdc] sm:$0xf]
    %v527 = vld [vmem:[#allocation10 + $0xe0] sm:$0xff]
    %v528 = vld [vmem:[#allocation10 + $0xe8] sm:$0xff]
    %v529 = vld [vmem:[#allocation10 + $0xf0] sm:$0xff]
    %v530 = vld [vmem:[#allocation10 + $0xf8] sm:$0xf]
    %v531 = vld [vmem:[#allocation10 + $0xfc] sm:$0xff]
    %v532 = vld [vmem:[#allocation10 + $0x104] sm:$0xff]
    %v533 = vld [vmem:[#allocation10 + $0x10c] sm:$0xff]
    %v534 = vld [vmem:[#allocation10 + $0x114] sm:$0xf]
    %v535 = vld [vmem:[#allocation10 + $0x118] sm:$0xff]
    %v536 = vld [vmem:[#allocation10 + $0x120] sm:$0xff]
    %v537 = vld [vmem:[#allocation10 + $0x128] sm:$0xff]
    %v538 = vld [vmem:[#allocation10 + $0x130] sm:$0xf]
    %v539 = vld [vmem:[#allocation10 + $0x134] sm:$0xff]
    %v540 = vld [vmem:[#allocation10 + $0x13c] sm:$0xff]
    %v541 = vld [vmem:[#allocation10 + $0x144] sm:$0xff]
    %v542 = vld [vmem:[#allocation10 + $0x14c] sm:$0xf]
    %v543 = vld [vmem:[#allocation10 + $0x150] sm:$0xff]
    %v544 = vld [vmem:[#allocation10 + $0x158] sm:$0xff]
    %v545 = vld [vmem:[#allocation10 + $0x160] sm:$0xff]
    %v546 = vld [vmem:[#allocation10 + $0x168] sm:$0xf]
    %v547 = vld [vmem:[#allocation10 + $0x16c] sm:$0xff]
    %v548 = vld [vmem:[#allocation10 + $0x174] sm:$0xff]
    %v549 = vld [vmem:[#allocation10 + $0x17c] sm:$0xff]
    %v550 = vld [vmem:[#allocation10 + $0x184] sm:$0xf]
    %v551 = vld [vmem:[#allocation10 + $0x188] sm:$0xff]
    %v552 = vld [vmem:[#allocation10 + $0x190] sm:$0xff]
    %v553 = vld [vmem:[#allocation10 + $0x198] sm:$0xff]
    %v554 = vld [vmem:[#allocation10 + $0x1a0] sm:$0xf]
    %v555 = vld [vmem:[#allocation10 + $0x1a4] sm:$0xff]
    %v556 = vld [vmem:[#allocation10 + $0x1ac] sm:$0xff]
    %v557 = vld [vmem:[#allocation10 + $0x1b4] sm:$0xff]
    %v558 = vld [vmem:[#allocation10 + $0x1bc] sm:$0xf]
    %v559 = vld [vmem:[#allocation10 + $0x1c0] sm:$0xff]
    %v560 = vld [vmem:[#allocation10 + $0x1c8] sm:$0xff]
    %v561 = vld [vmem:[#allocation10 + $0x1d0] sm:$0xff]
    %v562 = vld [vmem:[#allocation10 + $0x1d8] sm:$0xf]
    %v563 = vld [vmem:[#allocation10 + $0x1dc] sm:$0xff]
    %v564 = vld [vmem:[#allocation10 + $0x1e4] sm:$0xff]
    %v565 = vld [vmem:[#allocation10 + $0x1ec] sm:$0xff]
    %v566 = vld [vmem:[#allocation10 + $0x1f4] sm:$0xf]
    %v567 = vld [vmem:[#allocation10 + $0x1f8] sm:$0xff]
    %v568 = vld [vmem:[#allocation10 + $0x200] sm:$0xff]
    %v569 = vld [vmem:[#allocation10 + $0x208] sm:$0xff]
    %v570 = vld [vmem:[#allocation10 + $0x210] sm:$0xf]
    %v571 = vld [vmem:[#allocation10 + $0x214] sm:$0xff]
    %v572 = vld [vmem:[#allocation10 + $0x21c] sm:$0xff]
    %v573 = vld [vmem:[#allocation10 + $0x224] sm:$0xff]
    %v574 = vld [vmem:[#allocation10 + $0x22c] sm:$0xf]
    %v575 = vld [vmem:[#allocation10 + $0x230] sm:$0xff]
    %v576 = vld [vmem:[#allocation10 + $0x238] sm:$0xff]
    %v577 = vld [vmem:[#allocation10 + $0x240] sm:$0xff]
    %v578 = vld [vmem:[#allocation10 + $0x248] sm:$0xf]
    %v579 = vld [vmem:[#allocation10 + $0x24c] sm:$0xff]
    %v580 = vld [vmem:[#allocation10 + $0x254] sm:$0xff]
    %v581 = vld [vmem:[#allocation10 + $0x25c] sm:$0xff]
    %v582 = vld [vmem:[#allocation10 + $0x264] sm:$0xf]
    %v583 = vld [vmem:[#allocation10 + $0x268] sm:$0xff]
    %v584 = vld [vmem:[#allocation10 + $0x270] sm:$0xff]
    %v585 = vld [vmem:[#allocation10 + $0x278] sm:$0xff]
    %v586 = vld [vmem:[#allocation10 + $0x280] sm:$0xf]
    %v587 = vld [vmem:[#allocation10 + $0x284] sm:$0xff]
    %v588 = vld [vmem:[#allocation10 + $0x28c] sm:$0xff]
    %v589 = vld [vmem:[#allocation10 + $0x294] sm:$0xff]
    %v590 = vld [vmem:[#allocation10 + $0x29c] sm:$0xf]
    %v591 = vld [vmem:[#allocation10 + $0x2a0] sm:$0xff]
    %v592 = vld [vmem:[#allocation10 + $0x2a8] sm:$0xff]
    %v593 = vld [vmem:[#allocation10 + $0x2b0] sm:$0xff]
    %v594 = vld [vmem:[#allocation10 + $0x2b8] sm:$0xf]
    %v595 = vld [vmem:[#allocation10 + $0x2bc] sm:$0xff]
    %v596 = vld [vmem:[#allocation10 + $0x2c4] sm:$0xff]
    %v597 = vld [vmem:[#allocation10 + $0x2cc] sm:$0xff]
    %v598 = vld [vmem:[#allocation10 + $0x2d4] sm:$0xf]
    %v599 = vld [vmem:[#allocation10 + $0x2d8] sm:$0xff]
    %v600 = vld [vmem:[#allocation10 + $0x2e0] sm:$0xff]
    %v601 = vld [vmem:[#allocation10 + $0x2e8] sm:$0xff]
    %v602 = vld [vmem:[#allocation10 + $0x2f0] sm:$0xf]
    %v603 = vld [vmem:[#allocation10 + $0x2f4] sm:$0xff]
    %v604 = vld [vmem:[#allocation10 + $0x2fc] sm:$0xff]
    %v605 = vld [vmem:[#allocation10 + $0x304] sm:$0xff]
    %v606 = vld [vmem:[#allocation10 + $0x30c] sm:$0xf]
    %v607 = vld [vmem:[#allocation10 + $0x310] sm:$0xff]
    %v608 = vld [vmem:[#allocation10 + $0x318] sm:$0xff]
    %v609 = vld [vmem:[#allocation10 + $0x320] sm:$0xff]
    %v610 = vld [vmem:[#allocation10 + $0x328] sm:$0xf]
    %v611 = vld [vmem:[#allocation10 + $0x32c] sm:$0xff]
    %v612 = vld [vmem:[#allocation10 + $0x334] sm:$0xff]
    %v613 = vld [vmem:[#allocation10 + $0x33c] sm:$0xff]
    %v614 = vld [vmem:[#allocation10 + $0x344] sm:$0xf]
    %v615 = vld [vmem:[#allocation10 + $0x348] sm:$0xff]
    %v616 = vld [vmem:[#allocation10 + $0x350] sm:$0xff]
    %v617 = vld [vmem:[#allocation10 + $0x358] sm:$0xff]
    %v618 = vld [vmem:[#allocation10 + $0x360] sm:$0xf]
    %v619 = vld [vmem:[#allocation10 + $0x364] sm:$0xff]
    %v620 = vld [vmem:[#allocation10 + $0x36c] sm:$0xff]
    %v621 = vld [vmem:[#allocation10 + $0x374] sm:$0xff]
    %v622 = vld [vmem:[#allocation10 + $0x37c] sm:$0xf]
    %v623 = vld [vmem:[%s6] sm:$0xff]
    %v625 = vlaneseq
    %v626 = vshrl.u32 %v625, 7
    %v627 = vsub.s32 0, %v626
    %v628 = vrot.slane %v623, %v627
    %v629 = vlaneseq
    %v630 = vshrl.u32 %v629, 7
    %v631 = vsub.s32 1, %v630
    %v632 = vrot.slane %v623, %v631
    %v633 = vlaneseq
    %v634 = vshrl.u32 %v633, 7
    %v635 = vsub.s32 2, %v634
    %v636 = vrot.slane %v623, %v635
    %v637 = vlaneseq
    %v638 = vshrl.u32 %v637, 7
    %v639 = vsub.s32 3, %v638
    %v640 = vrot.slane %v623, %v639
    %v641 = vlaneseq
    %v642 = vshrl.u32 %v641, 7
    %v643 = vsub.s32 4, %v642
    %v644 = vrot.slane %v623, %v643
    %v645 = vlaneseq
    %v646 = vshrl.u32 %v645, 7
    %v647 = vsub.s32 5, %v646
    %v648 = vrot.slane %v623, %v647
    %v649 = vlaneseq
    %v650 = vshrl.u32 %v649, 7
    %v651 = vsub.s32 6, %v650
    %v652 = vrot.slane %v623, %v651
    %v788 = vunpack.c.l.b16 %v495
    %v789 = vunpack.c.h.b16 %v495
    %v790 = vunpack.c.l.b16 %v496
    %v791 = vunpack.c.h.b16 %v496
    %v792 = vunpack.c.l.b16 %v497
    %v793 = vunpack.c.h.b16 %v497
    %v794 = vunpack.c.l.b16 %v498
    %v795 = vunpack.c.l.b16 %v499
    %v796 = vunpack.c.h.b16 %v499
    %v797 = vunpack.c.l.b16 %v500
    %v798 = vunpack.c.h.b16 %v500
    %v799 = vunpack.c.l.b16 %v501
    %v800 = vunpack.c.h.b16 %v501
    %v801 = vunpack.c.l.b16 %v502
    %v802 = vunpack.c.l.b16 %v503
    %v803 = vunpack.c.h.b16 %v503
    %v804 = vunpack.c.l.b16 %v504
    %v805 = vunpack.c.h.b16 %v504
    %v806 = vunpack.c.l.b16 %v505
    %v807 = vunpack.c.h.b16 %v505
    %v808 = vunpack.c.l.b16 %v506
    %v809 = vunpack.c.l.b16 %v507
    %v810 = vunpack.c.h.b16 %v507
    %v811 = vunpack.c.l.b16 %v508
    %v812 = vunpack.c.h.b16 %v508
    %v813 = vunpack.c.l.b16 %v509
    %v814 = vunpack.c.h.b16 %v509
    %v815 = vunpack.c.l.b16 %v510
    %v816 = vunpack.c.l.b16 %v511
    %v817 = vunpack.c.h.b16 %v511
    %v818 = vunpack.c.l.b16 %v512
    %v819 = vunpack.c.h.b16 %v512
    %v820 = vunpack.c.l.b16 %v513
    %v821 = vunpack.c.h.b16 %v513
    %v822 = vunpack.c.l.b16 %v514
    %v823 = vunpack.c.l.b16 %v515
    %v824 = vunpack.c.h.b16 %v515
    %v825 = vunpack.c.l.b16 %v516
    %v826 = vunpack.c.h.b16 %v516
    %v827 = vunpack.c.l.b16 %v517
    %v828 = vunpack.c.h.b16 %v517
    %v829 = vunpack.c.l.b16 %v518
    %v830 = vunpack.c.l.b16 %v519
    %v831 = vunpack.c.h.b16 %v519
    %v832 = vunpack.c.l.b16 %v520
    %v833 = vunpack.c.h.b16 %v520
    %v834 = vunpack.c.l.b16 %v521
    %v835 = vunpack.c.h.b16 %v521
    %v836 = vunpack.c.l.b16 %v522
    %v837 = vunpack.c.l.b16 %v523
    %v838 = vunpack.c.h.b16 %v523
    %v839 = vunpack.c.l.b16 %v524
    %v840 = vunpack.c.h.b16 %v524
    %v841 = vunpack.c.l.b16 %v525
    %v842 = vunpack.c.h.b16 %v525
    %v843 = vunpack.c.l.b16 %v526
    %v844 = vunpack.c.l.b16 %v527
    %v845 = vunpack.c.h.b16 %v527
    %v846 = vunpack.c.l.b16 %v528
    %v847 = vunpack.c.h.b16 %v528
    %v848 = vunpack.c.l.b16 %v529
    %v849 = vunpack.c.h.b16 %v529
    %v850 = vunpack.c.l.b16 %v530
    %v851 = vunpack.c.l.b16 %v531
    %v852 = vunpack.c.h.b16 %v531
    %v853 = vunpack.c.l.b16 %v532
    %v854 = vunpack.c.h.b16 %v532
    %v855 = vunpack.c.l.b16 %v533
    %v856 = vunpack.c.h.b16 %v533
    %v857 = vunpack.c.l.b16 %v534
    %v858 = vunpack.c.l.b16 %v535
    %v859 = vunpack.c.h.b16 %v535
    %v860 = vunpack.c.l.b16 %v536
    %v861 = vunpack.c.h.b16 %v536
    %v862 = vunpack.c.l.b16 %v537
    %v863 = vunpack.c.h.b16 %v537
    %v864 = vunpack.c.l.b16 %v538
    %v865 = vunpack.c.l.b16 %v539
    %v866 = vunpack.c.h.b16 %v539
    %v867 = vunpack.c.l.b16 %v540
    %v868 = vunpack.c.h.b16 %v540
    %v869 = vunpack.c.l.b16 %v541
    %v870 = vunpack.c.h.b16 %v541
    %v871 = vunpack.c.l.b16 %v542
    %v872 = vunpack.c.l.b16 %v543
    %v873 = vunpack.c.h.b16 %v543
    %v874 = vunpack.c.l.b16 %v544
    %v875 = vunpack.c.h.b16 %v544
    %v876 = vunpack.c.l.b16 %v545
    %v877 = vunpack.c.h.b16 %v545
    %v878 = vunpack.c.l.b16 %v546
    %v879 = vunpack.c.l.b16 %v547
    %v880 = vunpack.c.h.b16 %v547
    %v881 = vunpack.c.l.b16 %v548
    %v882 = vunpack.c.h.b16 %v548
    %v883 = vunpack.c.l.b16 %v549
    %v884 = vunpack.c.h.b16 %v549
    %v885 = vunpack.c.l.b16 %v550
    %v886 = vunpack.c.l.b16 %v551
    %v887 = vunpack.c.h.b16 %v551
    %v888 = vunpack.c.l.b16 %v552
    %v889 = vunpack.c.h.b16 %v552
    %v890 = vunpack.c.l.b16 %v553
    %v891 = vunpack.c.h.b16 %v553
    %v892 = vunpack.c.l.b16 %v554
    %v893 = vunpack.c.l.b16 %v555
    %v894 = vunpack.c.h.b16 %v555
    %v895 = vunpack.c.l.b16 %v556
    %v896 = vunpack.c.h.b16 %v556
    %v897 = vunpack.c.l.b16 %v557
    %v898 = vunpack.c.h.b16 %v557
    %v899 = vunpack.c.l.b16 %v558
    %v900 = vunpack.c.l.b16 %v559
    %v901 = vunpack.c.h.b16 %v559
    %v902 = vunpack.c.l.b16 %v560
    %v903 = vunpack.c.h.b16 %v560
    %v904 = vunpack.c.l.b16 %v561
    %v905 = vunpack.c.h.b16 %v561
    %v906 = vunpack.c.l.b16 %v562
    %v907 = vunpack.c.l.b16 %v563
    %v908 = vunpack.c.h.b16 %v563
    %v909 = vunpack.c.l.b16 %v564
    %v910 = vunpack.c.h.b16 %v564
    %v911 = vunpack.c.l.b16 %v565
    %v912 = vunpack.c.h.b16 %v565
    %v913 = vunpack.c.l.b16 %v566
    %v914 = vunpack.c.l.b16 %v567
    %v915 = vunpack.c.h.b16 %v567
    %v916 = vunpack.c.l.b16 %v568
    %v917 = vunpack.c.h.b16 %v568
    %v918 = vunpack.c.l.b16 %v569
    %v919 = vunpack.c.h.b16 %v569
    %v920 = vunpack.c.l.b16 %v570
    %v921 = vunpack.c.l.b16 %v571
    %v922 = vunpack.c.h.b16 %v571
    %v923 = vunpack.c.l.b16 %v572
    %v924 = vunpack.c.h.b16 %v572
    %v925 = vunpack.c.l.b16 %v573
    %v926 = vunpack.c.h.b16 %v573
    %v927 = vunpack.c.l.b16 %v574
    %v928 = vunpack.c.l.b16 %v575
    %v929 = vunpack.c.h.b16 %v575
    %v930 = vunpack.c.l.b16 %v576
    %v931 = vunpack.c.h.b16 %v576
    %v932 = vunpack.c.l.b16 %v577
    %v933 = vunpack.c.h.b16 %v577
    %v934 = vunpack.c.l.b16 %v578
    %v935 = vunpack.c.l.b16 %v579
    %v936 = vunpack.c.h.b16 %v579
    %v937 = vunpack.c.l.b16 %v580
    %v938 = vunpack.c.h.b16 %v580
    %v939 = vunpack.c.l.b16 %v581
    %v940 = vunpack.c.h.b16 %v581
    %v941 = vunpack.c.l.b16 %v582
    %v942 = vunpack.c.l.b16 %v583
    %v943 = vunpack.c.h.b16 %v583
    %v944 = vunpack.c.l.b16 %v584
    %v945 = vunpack.c.h.b16 %v584
    %v946 = vunpack.c.l.b16 %v585
    %v947 = vunpack.c.h.b16 %v585
    %v948 = vunpack.c.l.b16 %v586
    %v949 = vunpack.c.l.b16 %v587
    %v950 = vunpack.c.h.b16 %v587
    %v951 = vunpack.c.l.b16 %v588
    %v952 = vunpack.c.h.b16 %v588
    %v953 = vunpack.c.l.b16 %v589
    %v954 = vunpack.c.h.b16 %v589
    %v955 = vunpack.c.l.b16 %v590
    %v956 = vunpack.c.l.b16 %v591
    %v957 = vunpack.c.h.b16 %v591
    %v958 = vunpack.c.l.b16 %v592
    %v959 = vunpack.c.h.b16 %v592
    %v960 = vunpack.c.l.b16 %v593
    %v961 = vunpack.c.h.b16 %v593
    %v962 = vunpack.c.l.b16 %v594
    %v963 = vunpack.c.l.b16 %v595
    %v964 = vunpack.c.h.b16 %v595
    %v965 = vunpack.c.l.b16 %v596
    %v966 = vunpack.c.h.b16 %v596
    %v967 = vunpack.c.l.b16 %v597
    %v968 = vunpack.c.h.b16 %v597
    %v969 = vunpack.c.l.b16 %v598
    %v970 = vunpack.c.l.b16 %v599
    %v971 = vunpack.c.h.b16 %v599
    %v972 = vunpack.c.l.b16 %v600
    %v973 = vunpack.c.h.b16 %v600
    %v974 = vunpack.c.l.b16 %v601
    %v975 = vunpack.c.h.b16 %v601
    %v976 = vunpack.c.l.b16 %v602
    %v977 = vunpack.c.l.b16 %v603
    %v978 = vunpack.c.h.b16 %v603
    %v979 = vunpack.c.l.b16 %v604
    %v980 = vunpack.c.h.b16 %v604
    %v981 = vunpack.c.l.b16 %v605
    %v982 = vunpack.c.h.b16 %v605
    %v983 = vunpack.c.l.b16 %v606
    %v984 = vunpack.c.l.b16 %v607
    %v985 = vunpack.c.h.b16 %v607
    %v986 = vunpack.c.l.b16 %v608
    %v987 = vunpack.c.h.b16 %v608
    %v988 = vunpack.c.l.b16 %v609
    %v989 = vunpack.c.h.b16 %v609
    %v990 = vunpack.c.l.b16 %v610
    %v991 = vunpack.c.l.b16 %v611
    %v992 = vunpack.c.h.b16 %v611
    %v993 = vunpack.c.l.b16 %v612
    %v994 = vunpack.c.h.b16 %v612
    %v995 = vunpack.c.l.b16 %v613
    %v996 = vunpack.c.h.b16 %v613
    %v997 = vunpack.c.l.b16 %v614
    %v998 = vunpack.c.l.b16 %v615
    %v999 = vunpack.c.h.b16 %v615
    %v1000 = vunpack.c.l.b16 %v616
    %v1001 = vunpack.c.h.b16 %v616
    %v1002 = vunpack.c.l.b16 %v617
    %v1003 = vunpack.c.h.b16 %v617
    %v1004 = vunpack.c.l.b16 %v618
    %v1005 = vunpack.c.l.b16 %v619
    %v1006 = vunpack.c.h.b16 %v619
    %v1007 = vunpack.c.l.b16 %v620
    %v1008 = vunpack.c.h.b16 %v620
    %v1009 = vunpack.c.l.b16 %v621
    %v1010 = vunpack.c.h.b16 %v621
    %v1011 = vunpack.c.l.b16 %v622
    %v1012 = vpack.c.b16 %v795, %v788
    %v1013 = vpack.c.b16 %v796, %v789
    %v1014 = vpack.c.b16 %v797, %v790
    %v1015 = vpack.c.b16 %v798, %v791
    %v1016 = vpack.c.b16 %v799, %v792
    %v1017 = vpack.c.b16 %v800, %v793
    %v1018 = vpack.c.b16 %v801, %v794
    %v1019 = vpack.c.b16 %v809, %v802
    %v1020 = vpack.c.b16 %v810, %v803
    %v1021 = vpack.c.b16 %v811, %v804
    %v1022 = vpack.c.b16 %v812, %v805
    %v1023 = vpack.c.b16 %v813, %v806
    %v1024 = vpack.c.b16 %v814, %v807
    %v1025 = vpack.c.b16 %v815, %v808
    %v1026 = vpack.c.b16 %v823, %v816
    %v1027 = vpack.c.b16 %v824, %v817
    %v1028 = vpack.c.b16 %v825, %v818
    %v1029 = vpack.c.b16 %v826, %v819
    %v1030 = vpack.c.b16 %v827, %v820
    %v1031 = vpack.c.b16 %v828, %v821
    %v1032 = vpack.c.b16 %v829, %v822
    %v1033 = vpack.c.b16 %v837, %v830
    %v1034 = vpack.c.b16 %v838, %v831
    %v1035 = vpack.c.b16 %v839, %v832
    %v1036 = vpack.c.b16 %v840, %v833
    %v1037 = vpack.c.b16 %v841, %v834
    %v1038 = vpack.c.b16 %v842, %v835
    %v1039 = vpack.c.b16 %v843, %v836
    %v1040 = vpack.c.b16 %v851, %v844
    %v1041 = vpack.c.b16 %v852, %v845
    %v1042 = vpack.c.b16 %v853, %v846
    %v1043 = vpack.c.b16 %v854, %v847
    %v1044 = vpack.c.b16 %v855, %v848
    %v1045 = vpack.c.b16 %v856, %v849
    %v1046 = vpack.c.b16 %v857, %v850
    %v1047 = vpack.c.b16 %v865, %v858
    %v1048 = vpack.c.b16 %v866, %v859
    %v1049 = vpack.c.b16 %v867, %v860
    %v1050 = vpack.c.b16 %v868, %v861
    %v1051 = vpack.c.b16 %v869, %v862
    %v1052 = vpack.c.b16 %v870, %v863
    %v1053 = vpack.c.b16 %v871, %v864
    %v1054 = vpack.c.b16 %v879, %v872
    %v1055 = vpack.c.b16 %v880, %v873
    %v1056 = vpack.c.b16 %v881, %v874
    %v1057 = vpack.c.b16 %v882, %v875
    %v1058 = vpack.c.b16 %v883, %v876
    %v1059 = vpack.c.b16 %v884, %v877
    %v1060 = vpack.c.b16 %v885, %v878
    %v1061 = vpack.c.b16 %v893, %v886
    %v1062 = vpack.c.b16 %v894, %v887
    %v1063 = vpack.c.b16 %v895, %v888
    %v1064 = vpack.c.b16 %v896, %v889
    %v1065 = vpack.c.b16 %v897, %v890
    %v1066 = vpack.c.b16 %v898, %v891
    %v1067 = vpack.c.b16 %v899, %v892
    %v1068 = vpack.c.b16 %v907, %v900
    %v1069 = vpack.c.b16 %v908, %v901
    %v1070 = vpack.c.b16 %v909, %v902
    %v1071 = vpack.c.b16 %v910, %v903
    %v1072 = vpack.c.b16 %v911, %v904
    %v1073 = vpack.c.b16 %v912, %v905
    %v1074 = vpack.c.b16 %v913, %v906
    %v1075 = vpack.c.b16 %v921, %v914
    %v1076 = vpack.c.b16 %v922, %v915
    %v1077 = vpack.c.b16 %v923, %v916
    %v1078 = vpack.c.b16 %v924, %v917
    %v1079 = vpack.c.b16 %v925, %v918
    %v1080 = vpack.c.b16 %v926, %v919
    %v1081 = vpack.c.b16 %v927, %v920
    %v1082 = vpack.c.b16 %v935, %v928
    %v1083 = vpack.c.b16 %v936, %v929
    %v1084 = vpack.c.b16 %v937, %v930
    %v1085 = vpack.c.b16 %v938, %v931
    %v1086 = vpack.c.b16 %v939, %v932
    %v1087 = vpack.c.b16 %v940, %v933
    %v1088 = vpack.c.b16 %v941, %v934
    %v1089 = vpack.c.b16 %v949, %v942
    %v1090 = vpack.c.b16 %v950, %v943
    %v1091 = vpack.c.b16 %v951, %v944
    %v1092 = vpack.c.b16 %v952, %v945
    %v1093 = vpack.c.b16 %v953, %v946
    %v1094 = vpack.c.b16 %v954, %v947
    %v1095 = vpack.c.b16 %v955, %v948
    %v1096 = vpack.c.b16 %v963, %v956
    %v1097 = vpack.c.b16 %v964, %v957
    %v1098 = vpack.c.b16 %v965, %v958
    %v1099 = vpack.c.b16 %v966, %v959
    %v1100 = vpack.c.b16 %v967, %v960
    %v1101 = vpack.c.b16 %v968, %v961
    %v1102 = vpack.c.b16 %v969, %v962
    %v1103 = vpack.c.b16 %v977, %v970
    %v1104 = vpack.c.b16 %v978, %v971
    %v1105 = vpack.c.b16 %v979, %v972
    %v1106 = vpack.c.b16 %v980, %v973
    %v1107 = vpack.c.b16 %v981, %v974
    %v1108 = vpack.c.b16 %v982, %v975
    %v1109 = vpack.c.b16 %v983, %v976
    %v1110 = vpack.c.b16 %v991, %v984
    %v1111 = vpack.c.b16 %v992, %v985
    %v1112 = vpack.c.b16 %v993, %v986
    %v1113 = vpack.c.b16 %v994, %v987
    %v1114 = vpack.c.b16 %v995, %v988
    %v1115 = vpack.c.b16 %v996, %v989
    %v1116 = vpack.c.b16 %v997, %v990
    %v1117 = vpack.c.b16 %v1005, %v998
    %v1118 = vpack.c.b16 %v1006, %v999
    %v1119 = vpack.c.b16 %v1007, %v1000
    %v1120 = vpack.c.b16 %v1008, %v1001
    %v1121 = vpack.c.b16 %v1009, %v1002
    %v1122 = vpack.c.b16 %v1010, %v1003
    %v1123 = vpack.c.b16 %v1011, %v1004
    %1236 = vmatprep.subr.bf16.mxu0 %v1062
    %1237 = vmatpush1.bf16.msra.mxu0 %v1061
    %1238 = vmatprep.subr.bf16.mxu0 %v1055
    %1239 = vmatpush1.bf16.msra.mxu0 %v1054
    %1240 = vmatprep.subr.bf16.mxu0 %v1048
    %1241 = vmatpush1.bf16.msra.mxu0 %v1047
    %1242 = vmatprep.subr.bf16.mxu0 %v1041
    %1243 = vmatpush1.bf16.msra.mxu0 %v1040
    %1244 = vmatprep.subr.bf16.mxu0 %v1034
    %1245 = vmatpush1.bf16.msra.mxu0 %v1033
    %1246 = vmatprep.subr.bf16.mxu0 %v1027
    %1247 = vmatpush1.bf16.msra.mxu0 %v1026
    %1248 = vmatprep.subr.bf16.mxu0 %v1020
    %1249 = vmatpush1.bf16.msra.mxu0 %v1019
    %1250 = vmatprep.subr.bf16.mxu0 %v1013
    %1251 = vmatpush1.bf16.msra.mxu0 %v1012
    %1252 = vmatprep.subr.bf16.mxu0 %v1118
    %1253 = vmatpush2.bf16.msra.mxu0 %v1117
    %1254 = vmatprep.subr.bf16.mxu0 %v1111
    %1255 = vmatpush2.bf16.msra.mxu0 %v1110
    %1256 = vmatprep.subr.bf16.mxu0 %v1104
    %1257 = vmatpush2.bf16.msra.mxu0 %v1103
    %1258 = vmatprep.subr.bf16.mxu0 %v1097
    %1259 = vmatpush2.bf16.msra.mxu0 %v1096
    %1260 = vmatprep.subr.bf16.mxu0 %v1090
    %1261 = vmatpush2.bf16.msra.mxu0 %v1089
    %1262 = vmatprep.subr.bf16.mxu0 %v1083
    %1263 = vmatpush2.bf16.msra.mxu0 %v1082
    %1264 = vmatprep.subr.bf16.mxu0 %v1076
    %1265 = vmatpush2.bf16.msra.mxu0 %v1075
    %1266 = vmatprep.subr.bf16.mxu0 %v1069
    %1267 = vmatpush2.bf16.msra.mxu0 %v1068
    %1268 = vmatprep.mubr.bf16.mxu0 %v494
    %1269 = vmatmul.mubr.bf16.gmra.mxu0 %v493
    %v1270 = vpop.f32.mrf.mxu0
    %v1271 = vadd.f32 %v628, %v1270
    %v1272 = vpop.f32.mrf.mxu0
    %v1273 = vadd.f32 %v632, %v1272
    %v1274 = vpop.f32.mrf.mxu0
    %v1275 = vpop.f32.mrf.mxu0
    %1276 = vdwg.mxu0
    %1277 = vmatprep.subr.bf16.mxu0 %v1064
    %1278 = vmatpush1.bf16.msra.mxu0 %v1063
    %1279 = vmatprep.subr.bf16.mxu0 %v1057
    %1280 = vmatpush1.bf16.msra.mxu0 %v1056
    %1281 = vmatprep.subr.bf16.mxu0 %v1050
    %1282 = vmatpush1.bf16.msra.mxu0 %v1049
    %1283 = vmatprep.subr.bf16.mxu0 %v1043
    %1284 = vmatpush1.bf16.msra.mxu0 %v1042
    %1285 = vmatprep.subr.bf16.mxu0 %v1036
    %1286 = vmatpush1.bf16.msra.mxu0 %v1035
    %1287 = vmatprep.subr.bf16.mxu0 %v1029
    %1288 = vmatpush1.bf16.msra.mxu0 %v1028
    %1289 = vmatprep.subr.bf16.mxu0 %v1022
    %1290 = vmatpush1.bf16.msra.mxu0 %v1021
    %1291 = vmatprep.subr.bf16.mxu0 %v1015
    %1292 = vmatpush1.bf16.msra.mxu0 %v1014
    %1293 = vmatprep.subr.bf16.mxu0 %v1120
    %1294 = vmatpush2.bf16.msra.mxu0 %v1119
    %1295 = vmatprep.subr.bf16.mxu0 %v1113
    %1296 = vmatpush2.bf16.msra.mxu0 %v1112
    %1297 = vmatprep.subr.bf16.mxu0 %v1106
    %1298 = vmatpush2.bf16.msra.mxu0 %v1105
    %1299 = vmatprep.subr.bf16.mxu0 %v1099
    %1300 = vmatpush2.bf16.msra.mxu0 %v1098
    %1301 = vmatprep.subr.bf16.mxu0 %v1092
    %1302 = vmatpush2.bf16.msra.mxu0 %v1091
    %1303 = vmatprep.subr.bf16.mxu0 %v1085
    %1304 = vmatpush2.bf16.msra.mxu0 %v1084
    %1305 = vmatprep.subr.bf16.mxu0 %v1078
    %1306 = vmatpush2.bf16.msra.mxu0 %v1077
    %1307 = vmatprep.subr.bf16.mxu0 %v1071
    %1308 = vmatpush2.bf16.msra.mxu0 %v1070
    %1309 = vmatprep.mubr.bf16.mxu0 %v494
    %1310 = vmatmul.mubr.bf16.gmra.mxu0 %v493
    %v1311 = vpop.f32.mrf.mxu0
    %v1312 = vadd.f32 %v636, %v1311
    %v1313 = vpop.f32.mrf.mxu0
    %v1314 = vadd.f32 %v640, %v1313
    %v1315 = vpop.f32.mrf.mxu0
    %v1316 = vpop.f32.mrf.mxu0
    %1317 = vdwg.mxu0
    %1318 = vmatprep.subr.bf16.mxu0 %v1066
    %1319 = vmatpush1.bf16.msra.mxu0 %v1065
    %1320 = vmatprep.subr.bf16.mxu0 %v1059
    %1321 = vmatpush1.bf16.msra.mxu0 %v1058
    %1322 = vmatprep.subr.bf16.mxu0 %v1052
    %1323 = vmatpush1.bf16.msra.mxu0 %v1051
    %1324 = vmatprep.subr.bf16.mxu0 %v1045
    %1325 = vmatpush1.bf16.msra.mxu0 %v1044
    %1326 = vmatprep.subr.bf16.mxu0 %v1038
    %1327 = vmatpush1.bf16.msra.mxu0 %v1037
    %1328 = vmatprep.subr.bf16.mxu0 %v1031
    %1329 = vmatpush1.bf16.msra.mxu0 %v1030
    %1330 = vmatprep.subr.bf16.mxu0 %v1024
    %1331 = vmatpush1.bf16.msra.mxu0 %v1023
    %1332 = vmatprep.subr.bf16.mxu0 %v1017
    %1333 = vmatpush1.bf16.msra.mxu0 %v1016
    %1334 = vmatprep.subr.bf16.mxu0 %v1122
    %1335 = vmatpush2.bf16.msra.mxu0 %v1121
    %1336 = vmatprep.subr.bf16.mxu0 %v1115
    %1337 = vmatpush2.bf16.msra.mxu0 %v1114
    %1338 = vmatprep.subr.bf16.mxu0 %v1108
    %1339 = vmatpush2.bf16.msra.mxu0 %v1107
    %1340 = vmatprep.subr.bf16.mxu0 %v1101
    %1341 = vmatpush2.bf16.msra.mxu0 %v1100
    %1342 = vmatprep.subr.bf16.mxu0 %v1094
    %1343 = vmatpush2.bf16.msra.mxu0 %v1093
    %1344 = vmatprep.subr.bf16.mxu0 %v1087
    %1345 = vmatpush2.bf16.msra.mxu0 %v1086
    %1346 = vmatprep.subr.bf16.mxu0 %v1080
    %1347 = vmatpush2.bf16.msra.mxu0 %v1079
    %1348 = vmatprep.subr.bf16.mxu0 %v1073
    %1349 = vmatpush2.bf16.msra.mxu0 %v1072
    %1350 = vmatprep.mubr.bf16.mxu0 %v494
    %1351 = vmatmul.mubr.bf16.gmra.mxu0 %v493
    %v1352 = vpop.f32.mrf.mxu0
    %v1353 = vadd.f32 %v644, %v1352
    %v1354 = vpop.f32.mrf.mxu0
    %v1355 = vadd.f32 %v648, %v1354
    %v1356 = vpop.f32.mrf.mxu0
    %v1357 = vpop.f32.mrf.mxu0
    %1358 = vdwg.mxu0
    %1359 = vmatprep.subr.bf16.mxu0 0
    %1360 = vmatpush1.bf16.msra.mxu0 %v1067
    %1361 = vmatprep.subr.bf16.mxu0 0
    %1362 = vmatpush1.bf16.msra.mxu0 %v1060
    %1363 = vmatprep.subr.bf16.mxu0 0
    %1364 = vmatpush1.bf16.msra.mxu0 %v1053
    %1365 = vmatprep.subr.bf16.mxu0 0
    %1366 = vmatpush1.bf16.msra.mxu0 %v1046
    %1367 = vmatprep.subr.bf16.mxu0 0
    %1368 = vmatpush1.bf16.msra.mxu0 %v1039
    %1369 = vmatprep.subr.bf16.mxu0 0
    %1370 = vmatpush1.bf16.msra.mxu0 %v1032
    %1371 = vmatprep.subr.bf16.mxu0 0
    %1372 = vmatpush1.bf16.msra.mxu0 %v1025
    %1373 = vmatprep.subr.bf16.mxu0 0
    %1374 = vmatpush1.bf16.msra.mxu0 %v1018
    %1375 = vmatprep.subr.bf16.mxu0 0
    %1376 = vmatpush2.bf16.msra.mxu0 %v1123
    %1377 = vmatprep.subr.bf16.mxu0 0
    %1378 = vmatpush2.bf16.msra.mxu0 %v1116
    %1379 = vmatprep.subr.bf16.mxu0 0
    %1380 = vmatpush2.bf16.msra.mxu0 %v1109
    %1381 = vmatprep.subr.bf16.mxu0 0
    %1382 = vmatpush2.bf16.msra.mxu0 %v1102
    %1383 = vmatprep.subr.bf16.mxu0 0
    %1384 = vmatpush2.bf16.msra.mxu0 %v1095
    %1385 = vmatprep.subr.bf16.mxu0 0
    %1386 = vmatpush2.bf16.msra.mxu0 %v1088
    %1387 = vmatprep.subr.bf16.mxu0 0
    %1388 = vmatpush2.bf16.msra.mxu0 %v1081
    %1389 = vmatprep.subr.bf16.mxu0 0
    %1390 = vmatpush2.bf16.msra.mxu0 %v1074
    %1391 = vmatprep.mubr.bf16.mxu0 %v494
    %1392 = vmatmul.mubr.bf16.gmra.mxu0 %v493
    %v1393 = vpop.f32.mrf.mxu0
    %v1394 = vadd.f32 %v652, %v1393
    %v1395 = vpop.f32.mrf.mxu0
    %v1396 = vpop.f32.mrf.mxu0
    %v1397 = vpop.f32.mrf.mxu0
    %1398 = vdwg.mxu0
    %v1399 = vpack.c.bf16 %v1271, %v1271
    %v1400 = vpack.c.bf16 %v1273, %v1273
    %v1401 = vpack.c.bf16 %v1312, %v1312
    %v1402 = vpack.c.bf16 %v1314, %v1314
    %v1403 = vpack.c.bf16 %v1353, %v1353
    %v1404 = vpack.c.bf16 %v1355, %v1355
    %v1405 = vpack.c.bf16 %v1394, %v1394
    %v1406 = vtanh.bf16.pop %v1399
    %v1407 = vtanh.bf16.pop %v1400
    %v1408 = vtanh.bf16.pop %v1401
    %v1409 = vtanh.bf16.pop %v1402
    %v1410 = vtanh.bf16.pop %v1403
    %v1411 = vtanh.bf16.pop %v1404
    %v1412 = vtanh.bf16.pop %v1405
    %v1420 = vunpack.c.l.b16 %v1406
    %v1421 = vunpack.c.l.b16 %v1407
    %v1422 = vunpack.c.l.b16 %v1408
    %v1423 = vunpack.c.l.b16 %v1409
    %v1424 = vunpack.c.l.b16 %v1410
    %v1425 = vunpack.c.l.b16 %v1411
    %v1426 = vunpack.c.l.b16 %v1412
    %v1427 = vpack.c.b16 %v1421, %v1420
    %v1428 = vpack.c.b16 %v1423, %v1422
    %v1429 = vpack.c.b16 %v1425, %v1424
    %v1430 = vpack.c.b16 %v1426, %v1426
    %1435 = vst [vmem:[#allocation11] sm:$0xff] %v1427
    %1436 = vst [vmem:[#allocation11 + $0x8] sm:$0xff] %v1428
    %1437 = vst [vmem:[#allocation11 + $0x10] sm:$0xff] %v1429
    %vm1438 = vcmask 125952
    %1439 = vst.msk [vmem:[#allocation11 + $0x18] sm:$0xf] %vm1438, %v1430
    // Predicated region
    $region50: #{tpu_custom_call.1} parent=1 // pred_check
      _
    $region51: #{tpu_custom_call.1} parent=1 // pred_check_branch
      %1441 = sbr.rel (0) target = $region53
    $region52: #{tpu_custom_call.1} parent=1 // pred_region
      %s1443 = ssub.s32 448, 448
      %1444 = vsyncadd [#allocation4], %s1443
      %s1446 = sshll.u32 [#allocation11], 4
      %s1447 = int_to_ptr.vmem [resolvable:$true] %s1446
      %1449 = dma.vmem_to_hbm [thread:$0]  %s1447, 448, %s7, [#allocation4]
    $region53: #{tpu_custom_call.1} parent=1 // pred_fallthru
      _
    // Predicated region
    $region54: #{tpu_custom_call.1} parent=1 // pred_check
      _
    $region55: #{tpu_custom_call.1} parent=1 // pred_check_branch
      %1451 = sbr.rel (0) target = $region57
    $region56: #{tpu_custom_call.1} parent=1 // pred_region
      %1452 = dma.done [#allocation4], 448
    $region57: #{tpu_custom_call.1} parent=1 // pred_fallthru
      _
    %1453 = vsyncpa [#allocation3], 1
    %1454 = vsyncpa [#allocation6], 1
    %1455 = vsyncpa [#allocation9], 1
    %1456 = vsyncpa [#allocation4], 1

</llo_original>
